<compile_context>
chip_gen: v7x
topology: tpu7x:2x2x1
jax: 0.10.0
libtpu: 0.0.40
codegen_flags: <defaults>
</compile_context>

<pallas_src>
import functools

import jax
import jax.numpy as jnp
from jax.experimental import pallas as pl
from jax.experimental.pallas import tpu as pltpu


def _round_up(n, m):
    return -(-n // m) * m


def _vmem_estimate(bb, tq, tk, d, x_bytes, x_full_k, tp):
    """Rough scoped-VMEM footprint: double-buffered blocks + scratch + temporaries."""
    lane_d = _round_up(d, 128)          # lane padding inside VMEM for small last dims
    lane_tk = _round_up(tk, 128)
    sub_tq = _round_up(tq, 8)
    sub_tk = _round_up(tk, 8)
    est = 0
    if x_full_k:
        est += 2 * bb * _round_up(tp, 8) * lane_d * x_bytes   # resident full-K x (dbl-buf)
    else:
        est += 2 * bb * sub_tk * lane_d * x_bytes             # per-k-tile x blocks
    est += 2 * bb * sub_tq * lane_d * x_bytes                 # output blocks
    est += 2 * bb * 8 * lane_tk * 4                           # pos_k blocks
    est += 2 * bb * sub_tq * 128 * 4                          # pos_q blocks
    est += bb * sub_tq * lane_d * 4                           # acc scratch
    est += bb * sub_tq * 128 * 4                              # denom scratch
    est += 5 * bb * sub_tq * lane_tk * 4                      # dv/dh/w/w_cast/staging temps
    return est


def _kernel_attention_kernel(pos_q_ref, pos_k_ref, x_ref, o_ref, acc_ref, den_ref,
                             *, neg_inv_two_sigma_sq, tk, x_full_k, dot_dtype):
    # pos_q_ref: (bb, tq, 2) f32      (query layout)
    # pos_k_ref: (bb, 2, tk) f32      (key layout)
    # x_ref:     (bb, Tp, D) or (bb, tk, D)  native dtype
    # o_ref:     (bb, tq, D)
    # acc_ref:   (bb, tq, D) f32 scratch (unnormalized output accumulator)
    # den_ref:   (bb, tq, 1) f32 scratch (row-sum of unnormalized weights)
    k_idx = pl.program_id(2)

    @pl.when(k_idx == 0)
    def _init():
        acc_ref[...] = jnp.zeros_like(acc_ref)
        den_ref[...] = jnp.zeros_like(den_ref)

    pos_q = pos_q_ref[...]                               # (bb, tq, 2) f32
    pos_k = pos_k_ref[...]                               # (bb, 2, tk) f32

    # pairwise squared distances, no in-kernel transpose (layouts prepared in wrapper)
    dv = pos_q[:, :, 0:1] - pos_k[:, 0:1, :]             # (bb, tq, tk)
    dh = pos_q[:, :, 1:2] - pos_k[:, 1:2, :]             # (bb, tq, tk)
    # unnormalized Gaussian weights in (0, 1]; exp args <= 0 so no max tracking needed
    w = jnp.exp((dv * dv + dh * dh) * neg_inv_two_sigma_sq)   # (bb, tq, tk) f32

    if x_full_k:
        # x held resident across the whole K axis; slice the current key tile.
        k_start = pl.multiple_of(k_idx * tk, tk)
        x = x_ref[:, pl.ds(k_start, tk), :]              # (bb, tk, D)
    else:
        x = x_ref[...]                                   # (bb, tk, D)
    if dot_dtype is not None and x.dtype != dot_dtype:
        x = x.astype(dot_dtype)

    # numerator and denominator use the SAME cast weights (bf16 rows renormalize exactly)
    w_cast = w.astype(x.dtype)
    acc_ref[...] += jnp.einsum("bqk,bkd->bqd", w_cast, x,
                               preferred_element_type=jnp.float32)
    den_ref[...] += jnp.sum(w_cast.astype(jnp.float32), axis=-1, keepdims=True)

    @pl.when(k_idx == pl.num_programs(2) - 1)
    def _finalize():
        o_ref[...] = (acc_ref[...] *
                      pl.reciprocal(den_ref[...], approx=True)).astype(o_ref.dtype)


def kernel_attention_2d(x, posv=None, posh=None, *, sigma=16.0, matmul_dtype=None):
    """Pallas implementation of KernelAttention2D.forward (eval mode).

    matmul_dtype: optional dtype for the MXU dot (e.g. jnp.bfloat16). Useful on
    v6e/v7x for f32 activations at large D where the matmul is the binding slot.
    """
    if posv is None or posh is None:
        return jnp.zeros_like(x)

    B, T, D = x.shape
    x_dtype = x.dtype
    x_bytes = jnp.dtype(x_dtype).itemsize

    # ---- generation-aware VMEM budget -------------------------------------
    try:
        info = pltpu.get_tpu_info()
        vmem_cap = int(getattr(info, "vmem_capacity_bytes", 64 << 20))
    except Exception:
        vmem_cap = 64 << 20                   # conservative (v7x) fallback
    big_vmem = vmem_cap >= (100 << 20)        # v5e / v6e (128 MiB) vs v7x (64 MiB)
    vmem_cap_limit = (100 << 20) if big_vmem else (48 << 20)
    vmem_floor = (64 << 20) if big_vmem else (32 << 20)

    # ---- tile selection ----------------------------------------------------
    single_tile_max = 1024 if big_vmem else 512
    if T <= single_tile_max:
        tq = tk = Tp = T                      # single (q, k) tile; full-dim blocks
    else:
        if big_vmem:
            tq, tk = 512, 1024
        else:
            tq, tk = 256, 512
        Tp = _round_up(T, max(tq, tk))        # common multiple of tq and tk

    # ---- wrapper-side padding (sequence only; D is never padded) -----------
    posv = posv.astype(jnp.float32)
    posh = posh.astype(jnp.float32)
    if Tp != T:
        # sentinel positions: distance^2 ~ 1e12 -> exp underflows to exactly 0,
        # so padded keys contribute nothing and padded rows are sliced away.
        x = jnp.pad(x, ((0, 0), (0, Tp - T), (0, 0)))
        posv = jnp.pad(posv, ((0, 0), (0, Tp - T)), constant_values=1e6)
        posh = jnp.pad(posh, ((0, 0), (0, Tp - T)), constant_values=1e6)

    # positions passed twice: key (lane) layout and query (sublane) layout
    pos_k = jnp.stack([posv, posh], axis=1)    # (B, 2, Tp)
    pos_q = jnp.stack([posv, posh], axis=-1)   # (B, Tp, 2)

    n_q = Tp // tq
    n_k = Tp // tk

    # ---- batch tile & x residency ------------------------------------------
    if Tp == tq:
        # small single-tile path: amortize ~0.35us/step overhead across batches,
        # but keep >= 2 parallel grid slices so both v7x TensorCores get work.
        bb = 1
        for cand in range(min(B, 8), 0, -1):
            if B % cand != 0:
                continue
            if B > 1 and (B // cand) * n_q < 2:
                continue
            if _vmem_estimate(cand, tq, tk, D, x_bytes, False, Tp) > vmem_cap_limit // 2:
                continue
            bb = cand
            break
        x_full_k = False                      # single k tile: x already fetched once
    else:
        bb = 1                                # tiled path: keep batch axis fully parallel
        # hold full-K x in VMEM (fetched once per batch) when it fits the budget
        x_full_k = (2 * _round_up(Tp, 8) * _round_up(D, 128) * x_bytes) <= (vmem_cap_limit // 3)

    grid = (B // bb, n_q, n_k)

    est = _vmem_estimate(bb, tq, tk, D, x_bytes, x_full_k, Tp)
    vmem_limit = int(min(max(2 * est, vmem_floor), vmem_cap_limit))

    kernel = functools.partial(
        _kernel_attention_kernel,
        neg_inv_two_sigma_sq=float(-1.0 / (2.0 * float(sigma) * float(sigma))),
        tk=tk, x_full_k=x_full_k, dot_dtype=matmul_dtype)

    if x_full_k:
        x_spec = pl.BlockSpec((bb, Tp, D), lambda b, q, k: (b, 0, 0))   # resident full-K x
    else:
        x_spec = pl.BlockSpec((bb, tk, D), lambda b, q, k: (b, k, 0))   # per-k-tile x

    out = pl.pallas_call(
        kernel,
        out_shape=jax.ShapeDtypeStruct((B, Tp, D), x_dtype),
        grid_spec=pltpu.PrefetchScalarGridSpec(
            num_scalar_prefetch=0,
            grid=grid,
            in_specs=[
                pl.BlockSpec((bb, tq, 2), lambda b, q, k: (b, q, 0)),   # pos (query layout)
                pl.BlockSpec((bb, 2, tk), lambda b, q, k: (b, 0, k)),   # pos (key layout)
                x_spec,                                                 # x
            ],
            out_specs=pl.BlockSpec((bb, tq, D), lambda b, q, k: (b, q, 0)),
            scratch_shapes=[
                pltpu.VMEM((bb, tq, D), jnp.float32),   # output accumulator
                pltpu.VMEM((bb, tq, 1), jnp.float32),   # row-sum denominator
            ],
        ),
        compiler_params=pltpu.CompilerParams(
            dimension_semantics=("parallel", "parallel", "arbitrary"),
            vmem_limit_bytes=vmem_limit,
        ),
    )(pos_q, pos_k, x)

    if Tp != T:
        out = out[:, :T, :]
    return out


def _reference(x, posv, posh, sigma=16.0):
    pos = jnp.stack([posv, posh], axis=-1).astype(jnp.float32)     # (B, T, 2)
    pos_diff = pos[:, :, None, :] - pos[:, None, :, :]             # (B, T, T, 2)
    dist_sq = jnp.sum(pos_diff ** 2, axis=-1)                      # (B, T, T)
    w = jnp.exp(-dist_sq / (2.0 * sigma ** 2))
    w = w / jnp.sum(w, axis=-1, keepdims=True)
    return jnp.einsum("btk,bkd->btd", w, x.astype(jnp.float32))


if __name__ == "__main__":
    sigma = 16.0

    # --- small config (batch=4, seq=8, hidden=32), f32 path ----------------
    B, T, D = 4, 8, 32
    key = jax.random.PRNGKey(0)
    kx, kv, kh = jax.random.split(key, 3)
    x = jax.random.normal(kx, (B, T, D), dtype=jnp.float32)
    posv = jax.random.randint(kv, (B, T), 0, 32).astype(jnp.float32)
    posh = jax.random.randint(kh, (B, T), 0, 32).astype(jnp.float32)

    out = jax.block_until_ready(kernel_attention_2d(x, posv, posh, sigma=sigma))
    ref = _reference(x, posv, posh, sigma=sigma)
    assert out.shape == (B, T, D)
    assert jnp.allclose(out, ref, atol=3e-3, rtol=3e-3), "f32 mismatch vs reference"

    # --- bf16 activations -> bf16 x bf16 MXU matmul path --------------------
    out_bf16 = jax.block_until_ready(
        kernel_attention_2d(x.astype(jnp.bfloat16), posv, posh, sigma=sigma))
    assert out_bf16.dtype == jnp.bfloat16
    assert jnp.allclose(out_bf16.astype(jnp.float32), ref, atol=5e-2, rtol=5e-2), \
        "bf16 mismatch vs reference"

    # --- larger sequence: exercises (q, k) tiling, sequence padding, and the
    #     resident full-K x path on every TPU generation ---------------------
    B2, T2, D2 = 2, 1100, 32
    kx2, kv2, kh2 = jax.random.split(jax.random.PRNGKey(1), 3)
    x2 = jax.random.normal(kx2, (B2, T2, D2), dtype=jnp.float32)
    posv2 = jax.random.randint(kv2, (B2, T2), 0, 64).astype(jnp.float32)
    posh2 = jax.random.randint(kh2, (B2, T2), 0, 64).astype(jnp.float32)
    out2 = jax.block_until_ready(kernel_attention_2d(x2, posv2, posh2, sigma=sigma))
    ref2 = _reference(x2, posv2, posh2, sigma=sigma)
    assert out2.shape == (B2, T2, D2)
    assert jnp.allclose(out2, ref2, atol=3e-3, rtol=3e-3), "tiled-path mismatch vs reference"

    # --- None-position branch returns zeros, same as the PyTorch module -----
    zeros = jax.block_until_ready(kernel_attention_2d(x))
    assert jnp.all(zeros == 0.0)

    print("KERNEL_OK")
</pallas_src>

<mosaic_0001>
module attributes {stable_mosaic.version = 11 : i64} {
  func.func @_kernel_attention_kernel(%arg0: i32, %arg1: i32, %arg2: i32, %arg3: memref<2x8x2xf32, #tpu.memory_space<vmem>>, %arg4: memref<2x2x8xf32, #tpu.memory_space<vmem>>, %arg5: memref<2x8x32xf32, #tpu.memory_space<vmem>>, %arg6: memref<2x8x32xf32, #tpu.memory_space<vmem>>, %arg7: memref<2x8x32xf32, #tpu.memory_space<vmem>>, %arg8: memref<2x8x1xf32, #tpu.memory_space<vmem>>) attributes {dimension_semantics = [#tpu.dimension_semantics<parallel>, #tpu.dimension_semantics<parallel>, #tpu.dimension_semantics<arbitrary>], iteration_bounds = array<i64: 2, 1, 1>, scalar_prefetch = 0 : i64, scratch_operands = 2 : i64, tpu.core_type = #tpu.core_type<tc>, window_params = [{transform_indices = @transform_0, window_bounds = array<i64: 2, 8, 2>}, {transform_indices = @transform_1, window_bounds = array<i64: 2, 2, 8>}, {transform_indices = @transform_2, window_bounds = array<i64: 2, 8, 32>}, {transform_indices = @transform_3, window_bounds = array<i64: 2, 8, 32>}]} {
    %c0_i32 = arith.constant 0 : i32
    %0 = arith.cmpi eq, %arg2, %c0_i32 : i32
    %1 = arith.extui %0 : i1 to i32
    %c0_i32_0 = arith.constant 0 : i32
    %2 = arith.cmpi ne, %1, %c0_i32_0 : i32
    scf.if %2 {
      %cst_25 = arith.constant 0.000000e+00 : f32
      %34 = vector.broadcast %cst_25 : f32 to vector<2x8x32xf32>
      %c0_26 = arith.constant 0 : index
      %c0_27 = arith.constant 0 : index
      %c0_28 = arith.constant 0 : index
      %35 = vector.load %arg7[%c0_26, %c0_27, %c0_28] : memref<2x8x32xf32, #tpu.memory_space<vmem>>, vector<2x8x32xf32>
      tpu.vector_store %arg7[%c0_26, %c0_27, %c0_28], %34 {strides = array<i32>} : memref<2x8x32xf32, #tpu.memory_space<vmem>>, vector<2x8x32xf32>,
      %cst_29 = arith.constant 0.000000e+00 : f32
      %36 = vector.broadcast %cst_29 : f32 to vector<2x8x1xf32>
      %c0_30 = arith.constant 0 : index
      %c0_31 = arith.constant 0 : index
      %c0_32 = arith.constant 0 : index
      %37 = vector.load %arg8[%c0_30, %c0_31, %c0_32] : memref<2x8x1xf32, #tpu.memory_space<vmem>>, vector<2x8x1xf32>
      tpu.vector_store %arg8[%c0_30, %c0_31, %c0_32], %36 {strides = array<i32>} : memref<2x8x1xf32, #tpu.memory_space<vmem>>, vector<2x8x1xf32>,
    } else {
    }
    %c0 = arith.constant 0 : index
    %c0_1 = arith.constant 0 : index
    %c0_2 = arith.constant 0 : index
    %3 = vector.load %arg3[%c0, %c0_1, %c0_2] : memref<2x8x2xf32, #tpu.memory_space<vmem>>, vector<2x8x2xf32>
    %c0_3 = arith.constant 0 : index
    %c0_4 = arith.constant 0 : index
    %c0_5 = arith.constant 0 : index
    %4 = vector.load %arg4[%c0_3, %c0_4, %c0_5] : memref<2x2x8xf32, #tpu.memory_space<vmem>>, vector<2x2x8xf32>
    %5 = vector.extract_strided_slice %3 {offsets = [0, 0, 0], sizes = [2, 8, 1], strides = [1, 1, 1]} : vector<2x8x2xf32> to vector<2x8x1xf32>
    %6 = vector.extract_strided_slice %4 {offsets = [0, 0, 0], sizes = [2, 1, 8], strides = [1, 1, 1]} : vector<2x2x8xf32> to vector<2x1x8xf32>
    %7 = vector.broadcast %5 : vector<2x8x1xf32> to vector<2x8x8xf32>
    %8 = vector.broadcast %6 : vector<2x1x8xf32> to vector<2x8x8xf32>
    %9 = arith.subf %7, %8 : vector<2x8x8xf32>
    %10 = vector.extract_strided_slice %3 {offsets = [0, 0, 1], sizes = [2, 8, 1], strides = [1, 1, 1]} : vector<2x8x2xf32> to vector<2x8x1xf32>
    %11 = vector.extract_strided_slice %4 {offsets = [0, 1, 0], sizes = [2, 1, 8], strides = [1, 1, 1]} : vector<2x2x8xf32> to vector<2x1x8xf32>
    %12 = vector.broadcast %10 : vector<2x8x1xf32> to vector<2x8x8xf32>
    %13 = vector.broadcast %11 : vector<2x1x8xf32> to vector<2x8x8xf32>
    %14 = arith.subf %12, %13 : vector<2x8x8xf32>
    %15 = arith.mulf %9, %9 : vector<2x8x8xf32>
    %16 = arith.mulf %14, %14 : vector<2x8x8xf32>
    %17 = arith.addf %15, %16 : vector<2x8x8xf32>
    %cst = arith.constant -0.001953125 : f32
    %18 = vector.broadcast %cst : f32 to vector<2x8x8xf32>
    %19 = arith.mulf %17, %18 : vector<2x8x8xf32>
    %20 = math.exp %19 : vector<2x8x8xf32>
    %c0_6 = arith.constant 0 : index
    %c0_7 = arith.constant 0 : index
    %c0_8 = arith.constant 0 : index
    %21 = vector.load %arg5[%c0_6, %c0_7, %c0_8] : memref<2x8x32xf32, #tpu.memory_space<vmem>>, vector<2x8x32xf32>
    %c0_9 = arith.constant 0 : index
    %c0_10 = arith.constant 0 : index
    %c0_11 = arith.constant 0 : index
    %22 = vector.load %arg7[%c0_9, %c0_10, %c0_11] : memref<2x8x32xf32, #tpu.memory_space<vmem>>, vector<2x8x32xf32>
    "tpu.trace_start"() <{level = 10 : i32, message = "bqk,bkd->bqd"}> : () -> ()
    %cst_12 = arith.constant dense<0.000000e+00> : vector<2x8x32xf32>
    %23 = tpu.matmul %20, %21, %cst_12 {dimension_numbers = #tpu.dot_dimension_numbers<[2], [1], [1], [2], [0, 0, 0, 1, 1, 2], [0], [0]>} : vector<2x8x8xf32>, vector<2x8x32xf32>, vector<2x8x32xf32> -> vector<2x8x32xf32>
    "tpu.trace_stop"() : () -> ()
    %24 = arith.addf %22, %23 : vector<2x8x32xf32>
    %c0_13 = arith.constant 0 : index
    %c0_14 = arith.constant 0 : index
    %c0_15 = arith.constant 0 : index
    %25 = vector.load %arg7[%c0_13, %c0_14, %c0_15] : memref<2x8x32xf32, #tpu.memory_space<vmem>>, vector<2x8x32xf32>
    tpu.vector_store %arg7[%c0_13, %c0_14, %c0_15], %24 {strides = array<i32>} : memref<2x8x32xf32, #tpu.memory_space<vmem>>, vector<2x8x32xf32>,
    %c0_16 = arith.constant 0 : index
    %c0_17 = arith.constant 0 : index
    %c0_18 = arith.constant 0 : index
    %26 = vector.load %arg8[%c0_16, %c0_17, %c0_18] : memref<2x8x1xf32, #tpu.memory_space<vmem>>, vector<2x8x1xf32>
    %cst_19 = arith.constant dense<0.000000e+00> : vector<2x8xf32>
    %27 = vector.multi_reduction <add>, %20, %cst_19 [2] : vector<2x8x8xf32> to vector<2x8xf32>
    %28 = vector.shape_cast %27 : vector<2x8xf32> to vector<2x8x1xf32>
    %29 = arith.addf %26, %28 : vector<2x8x1xf32>
    %c0_20 = arith.constant 0 : index
    %c0_21 = arith.constant 0 : index
    %c0_22 = arith.constant 0 : index
    %30 = vector.load %arg8[%c0_20, %c0_21, %c0_22] : memref<2x8x1xf32, #tpu.memory_space<vmem>>, vector<2x8x1xf32>
    tpu.vector_store %arg8[%c0_20, %c0_21, %c0_22], %29 {strides = array<i32>} : memref<2x8x1xf32, #tpu.memory_space<vmem>>, vector<2x8x1xf32>,
    %c0_i32_23 = arith.constant 0 : i32
    %31 = arith.cmpi eq, %arg2, %c0_i32_23 : i32
    %32 = arith.extui %31 : i1 to i32
    %c0_i32_24 = arith.constant 0 : i32
    %33 = arith.cmpi ne, %32, %c0_i32_24 : i32
    scf.if %33 {
      %c0_25 = arith.constant 0 : index
      %c0_26 = arith.constant 0 : index
      %c0_27 = arith.constant 0 : index
      %34 = vector.load %arg7[%c0_25, %c0_26, %c0_27] : memref<2x8x32xf32, #tpu.memory_space<vmem>>, vector<2x8x32xf32>
      %c0_28 = arith.constant 0 : index
      %c0_29 = arith.constant 0 : index
      %c0_30 = arith.constant 0 : index
      %35 = vector.load %arg8[%c0_28, %c0_29, %c0_30] : memref<2x8x1xf32, #tpu.memory_space<vmem>>, vector<2x8x1xf32>
      %36 = tpu.reciprocal %35 {approx = true} : vector<2x8x1xf32> -> vector<2x8x1xf32>
      %37 = vector.broadcast %36 : vector<2x8x1xf32> to vector<2x8x32xf32>
      %38 = arith.mulf %34, %37 : vector<2x8x32xf32>
      %c0_31 = arith.constant 0 : index
      %c0_32 = arith.constant 0 : index
      %c0_33 = arith.constant 0 : index
      %39 = vector.load %arg6[%c0_31, %c0_32, %c0_33] : memref<2x8x32xf32, #tpu.memory_space<vmem>>, vector<2x8x32xf32>
      tpu.vector_store %arg6[%c0_31, %c0_32, %c0_33], %38 {strides = array<i32>} : memref<2x8x32xf32, #tpu.memory_space<vmem>>, vector<2x8x32xf32>,
    } else {
    }
    return
  }
  func.func @transform_0(%arg0: i32, %arg1: i32, %arg2: i32) -> (i32, i32, i32) {
    %c0_i32 = arith.constant 0 : i32
    %c0_i32_0 = arith.constant 0 : i32
    return %arg0, %arg1, %c0_i32 : i32, i32, i32
  }
  func.func @transform_1(%arg0: i32, %arg1: i32, %arg2: i32) -> (i32, i32, i32) {
    %c0_i32 = arith.constant 0 : i32
    %c0_i32_0 = arith.constant 0 : i32
    return %arg0, %c0_i32, %arg2 : i32, i32, i32
  }
  func.func @transform_2(%arg0: i32, %arg1: i32, %arg2: i32) -> (i32, i32, i32) {
    %c0_i32 = arith.constant 0 : i32
    %c0_i32_0 = arith.constant 0 : i32
    return %arg0, %arg2, %c0_i32 : i32, i32, i32
  }
  func.func @transform_3(%arg0: i32, %arg1: i32, %arg2: i32) -> (i32, i32, i32) {
    %c0_i32 = arith.constant 0 : i32
    %c0_i32_0 = arith.constant 0 : i32
    return %arg0, %arg1, %c0_i32 : i32, i32, i32
  }
}

</mosaic_0001>

<llo_original>
// kernel: tpu_custom_call.1
$region0: #{tpu_custom_call.1}
  #allocation0 [shape = 'u32[]', space=smem, size = 0x4, offset = 0x4, fixed_abs, tag = 'smem constant byte address 0x4 - core index']
  #allocation1 [shape = 'u32[144,128]{1,0:T(1,128)}', space=vmem, size = 0x12000, scoped, tag = 'internal scratch']
  #allocation2 [shape = 'f32[2,8,32]{2,1,0:T(8,128)}', space=vmem, size = 0x2000, scoped, tag = 'scratch operand']
  #allocation3 [shape = 'f32[2,8,1]{2,1,0:T(8,128)}', space=vmem, size = 0x2000, scoped, tag = 'scratch operand']
  %s0 = inlined_call_operand.vmem [shape: f32[4,8,2], index: 0, kind: input, shape index: {}]
  %s1 = inlined_call_operand.vmem [shape: f32[4,2,8], index: 1, kind: input, shape index: {}]
  %s2 = inlined_call_operand.vmem [shape: f32[4,8,32], index: 2, kind: input, shape index: {}]
  %s3 = inlined_call_operand.hbm [shape: f32[4,8,32], index: 3, kind: output, shape index: {}]
  %s4 = sld [smem:[#allocation0]]
  $region53: #{tpu_custom_call.1} parent=0
    _
  %s6 = ssub.s32 1, %s4
  %s7 = scalar_select 0, %s6, %s4
  $region1: #{tpu_custom_call.1} parent=0
    #allocation4 [shape = 'u8[16384]{0}', space=vmem, size = 0x4000, scoped, tag = 'output window, operand 0']
    #allocation5 [shape = 's32[2]{0}', space=sflag, size = 0x8, scoped, tag = 'scoped memory for tpu_custom_call.1']
    %8 = vsyncpa [#allocation5], 0
    %s9 = scalar_lea.sflag [#allocation5], 1
    %10 = vsyncpa %s9, 0
    loop: start=0, step=1, limit=4
    $region2: #{tpu_custom_call.1} parent=1 // loop_pre_header
      _
    $region3: #{tpu_custom_call.1} parent=1 // loop_header
      %s12 = sphi 0, %s16
      %p13 = scmp.ge.s32.totalorder %s12, 4
      %s19 = sphi 0, %s38
      %s20 = sphi 0, %s34
      %s21 = sphi 0, %s30
      %s22 = sphi 0, %s19
      %s23 = sphi 0, %s20
      %s24 = sphi 0, %s21
      %s25 = sphi 0, %s22
      %s26 = sphi 0, %s23
      %s27 = sphi 0, %s24
      %s43 = sphi 0, %s45
      %s46 = sphi 0, %s43
      %s47 = sphi 0, %s46
      %s63 = sphi 0, %s47
      %s71 = sphi 0, %s73
      %s74 = sphi 0, %s71
      %s75 = sphi 0, %s74
      %s91 = sphi 0, %s75
      %s99 = sphi 0, %s101
      %s102 = sphi 0, %s99
      %s103 = sphi 0, %s102
      %s119 = sphi 0, %s103
      %s127 = sphi 0, %s129
      %s130 = sphi 0, %s127
      %s131 = sphi 0, %s130
      %s147 = sphi 0, %s131
    $region4: #{tpu_custom_call.1} parent=1 // loop_header_branch
      %15 = sbr.rel (%p13) target = $region8
    $region5: #{tpu_custom_call.1} parent=1 // loop_body
      %s17 = ssub.s32 %s12, 1
      %s18 = ssub.s32 %s12, 2
      %s28 = sadd.s32 1, %s21
      %p29 = scmp.ge.s32.totalorder %s28, 1
      %s30 = scalar_select %p29, 0, %s28
      %s31 = sadd.s32 1, %s20
      %s32 = scalar_select %p29, %s31, %s20
      %p33 = scmp.ge.s32.totalorder %s32, 1
      %s34 = scalar_select %p33, 0, %s32
      %s35 = sadd.s32 1, %s19
      %s36 = scalar_select %p33, %s35, %s19
      %p37 = scmp.ge.s32.totalorder %s36, 2
      %s38 = scalar_select %p37, 0, %s36
      %s39 = ssub.s32 %s19, %s38
      %s40 = ssub.s32 %s20, %s34
      %s41 = sor.u32 %s39, %s40
      %p42 = scmp.eq.s32.totalorder %s41, 0
      %s44 = sadd.s32 %s43, 1
      %s45 = scalar_select %p42, %s43, %s44
      %p48 = pneg %p42
      %p49 = scmp.eq.s32.totalorder %s12, 1
      %p50 = por %p48, %p49
      %p51 = scmp.ne.s32.totalorder %s43, %s46
      %p52 = scmp.eq.s32.totalorder %s12, 0
      %p53 = por %p51, %p52
      %p54 = scmp.ne.s32.totalorder %s43, %s46
      %p55 = scmp.eq.s32.totalorder %s17, 1
      %p56 = por %p54, %p55
      %p57 = scmp.ne.s32.totalorder %s46, %s47
      %p58 = scmp.eq.s32.totalorder %s17, 0
      %p59 = por %p57, %p58
      %p60 = scmp.ne.s32.totalorder %s46, %s47
      %p61 = scmp.eq.s32.totalorder %s18, 1
      %p62 = por %p60, %p61
      %p64 = scmp.ne.s32.totalorder %s47, %s63
      %p65 = scmp.eq.s32.totalorder %s18, 0
      %p66 = por %p64, %p65
      %s67 = ssub.s32 %s19, %s38
      %s68 = ssub.s32 %s21, %s30
      %s69 = sor.u32 %s67, %s68
      %p70 = scmp.eq.s32.totalorder %s69, 0
      %s72 = sadd.s32 %s71, 1
      %s73 = scalar_select %p70, %s71, %s72
      %p76 = pneg %p70
      %p77 = scmp.eq.s32.totalorder %s12, 1
      %p78 = por %p76, %p77
      %p79 = scmp.ne.s32.totalorder %s71, %s74
      %p80 = scmp.eq.s32.totalorder %s12, 0
      %p81 = por %p79, %p80
      %p82 = scmp.ne.s32.totalorder %s71, %s74
      %p83 = scmp.eq.s32.totalorder %s17, 1
      %p84 = por %p82, %p83
      %p85 = scmp.ne.s32.totalorder %s74, %s75
      %p86 = scmp.eq.s32.totalorder %s17, 0
      %p87 = por %p85, %p86
      %p88 = scmp.ne.s32.totalorder %s74, %s75
      %p89 = scmp.eq.s32.totalorder %s18, 1
      %p90 = por %p88, %p89
      %p92 = scmp.ne.s32.totalorder %s75, %s91
      %p93 = scmp.eq.s32.totalorder %s18, 0
      %p94 = por %p92, %p93
      %s95 = ssub.s32 %s19, %s38
      %s96 = ssub.s32 %s21, %s30
      %s97 = sor.u32 %s95, %s96
      %p98 = scmp.eq.s32.totalorder %s97, 0
      %s100 = sadd.s32 %s99, 1
      %s101 = scalar_select %p98, %s99, %s100
      %p104 = pneg %p98
      %p105 = scmp.eq.s32.totalorder %s12, 1
      %p106 = por %p104, %p105
      %p107 = scmp.ne.s32.totalorder %s99, %s102
      %p108 = scmp.eq.s32.totalorder %s12, 0
      %p109 = por %p107, %p108
      %p110 = scmp.ne.s32.totalorder %s99, %s102
      %p111 = scmp.eq.s32.totalorder %s17, 1
      %p112 = por %p110, %p111
      %p113 = scmp.ne.s32.totalorder %s102, %s103
      %p114 = scmp.eq.s32.totalorder %s17, 0
      %p115 = por %p113, %p114
      %p116 = scmp.ne.s32.totalorder %s102, %s103
      %p117 = scmp.eq.s32.totalorder %s18, 1
      %p118 = por %p116, %p117
      %p120 = scmp.ne.s32.totalorder %s103, %s119
      %p121 = scmp.eq.s32.totalorder %s18, 0
      %p122 = por %p120, %p121
      %s123 = ssub.s32 %s19, %s38
      %s124 = ssub.s32 %s20, %s34
      %s125 = sor.u32 %s123, %s124
      %p126 = scmp.eq.s32.totalorder %s125, 0
      %s128 = sadd.s32 %s127, 1
      %s129 = scalar_select %p126, %s127, %s128
      %p132 = pneg %p126
      %p133 = scmp.eq.s32.totalorder %s12, 1
      %p134 = por %p132, %p133
      %p135 = scmp.ne.s32.totalorder %s127, %s130
      %p136 = scmp.eq.s32.totalorder %s12, 0
      %p137 = por %p135, %p136
      %p138 = scmp.ne.s32.totalorder %s127, %s130
      %p139 = scmp.eq.s32.totalorder %s17, 1
      %p140 = por %p138, %p139
      %p141 = scmp.ne.s32.totalorder %s130, %s131
      %p142 = scmp.eq.s32.totalorder %s17, 0
      %p143 = por %p141, %p142
      %p144 = scmp.ne.s32.totalorder %s130, %s131
      %p145 = scmp.eq.s32.totalorder %s18, 1
      %p146 = por %p144, %p145
      %p148 = scmp.ne.s32.totalorder %s131, %s147
      %p149 = scmp.eq.s32.totalorder %s18, 0
      %p150 = por %p148, %p149
      %p151 = scmp.le.s32.totalorder 1, %s12
      %p152 = scmp.lt.s32.totalorder %s12, 3
      %p153 = pnand %p151, %p152
      %p154 = pneg %p153
      // Predicated region
      $region9: #{tpu_custom_call.1} parent=5 // pred_check
        _
      $region10: #{tpu_custom_call.1} parent=5 // pred_check_branch
        %156 = sbr.rel (%p153) target = $region12
      $region11: #{tpu_custom_call.1} parent=5 // pred_region
        %s157 = ssub.s32 %s12, 1
      $region12: #{tpu_custom_call.1} parent=5 // pred_fallthru
        _
      %p158 = scmp.lt.s32.totalorder %s12, 2
      // Predicated region
      $region13: #{tpu_custom_call.1} parent=5 // pred_check
        %p159 = pneg %p158
      $region14: #{tpu_custom_call.1} parent=5 // pred_check_branch
        %161 = sbr.rel (%p159) target = $region16
      $region15: #{tpu_custom_call.1} parent=5 // pred_region
        // Predicated region
        $region17: #{tpu_custom_call.1} parent=15 // pred_check
          %p162 = pneg %p53
        $region18: #{tpu_custom_call.1} parent=15 // pred_check_branch
          %164 = sbr.rel (%p162) target = $region20
        $region19: #{tpu_custom_call.1} parent=15 // pred_region
          %s165 = smul.u32 2, %s19
          %p166 = scmp.lt.s32.totalorder %s165, 3
          %s167 = scalar_select %p166, %s165, 3
          %p168 = scmp.lt.s32.totalorder %s20, 0
          %s169 = scalar_select %p168, %s20, 0
          %s170 = sadd.s32 %s169, %s167
          %s171 = smul.addr %s170, 8
          %s172 = scalar_lea.vmem %s0, %s171
          %s173 = smul.u32 2, %s19
        $region20: #{tpu_custom_call.1} parent=15 // pred_fallthru
          _
        // Predicated region
        $region21: #{tpu_custom_call.1} parent=15 // pred_check
          %p174 = pneg %p81
        $region22: #{tpu_custom_call.1} parent=15 // pred_check_branch
          %176 = sbr.rel (%p174) target = $region24
        $region23: #{tpu_custom_call.1} parent=15 // pred_region
          %s177 = smul.u32 2, %s19
          %p178 = scmp.lt.s32.totalorder %s177, 3
          %s179 = scalar_select %p178, %s177, 3
          %p180 = scmp.lt.s32.totalorder %s21, 0
          %s181 = scalar_select %p180, %s21, 0
          %s182 = sadd.s32 %s181, %s179
          %s183 = smul.addr %s182, 2
          %s184 = scalar_lea.vmem %s1, %s183
          %s185 = smul.u32 2, %s19
        $region24: #{tpu_custom_call.1} parent=15 // pred_fallthru
          _
        // Predicated region
        $region25: #{tpu_custom_call.1} parent=15 // pred_check
          %p186 = pneg %p109
        $region26: #{tpu_custom_call.1} parent=15 // pred_check_branch
          %188 = sbr.rel (%p186) target = $region28
        $region27: #{tpu_custom_call.1} parent=15 // pred_region
          %s189 = smul.u32 2, %s19
          %p190 = scmp.lt.s32.totalorder %s189, 3
          %s191 = scalar_select %p190, %s189, 3
          %p192 = scmp.lt.s32.totalorder %s21, 0
          %s193 = scalar_select %p192, %s21, 0
          %s194 = sadd.s32 %s193, %s191
          %s195 = smul.addr %s194, 8
          %s196 = scalar_lea.vmem %s2, %s195
          %s197 = smul.u32 2, %s19
        $region28: #{tpu_custom_call.1} parent=15 // pred_fallthru
          _
      $region16: #{tpu_custom_call.1} parent=5 // pred_fallthru
        _
      %p198 = scmp.le.s32.totalorder 1, %s12
      %p199 = scmp.lt.s32.totalorder %s12, 3
      %p200 = pnand %p198, %p199
      %p201 = pneg %p200
      // Predicated region
      $region29: #{tpu_custom_call.1} parent=5 // pred_check
        _
      $region30: #{tpu_custom_call.1} parent=5 // pred_check_branch
        %203 = sbr.rel (%p200) target = $region32
      $region31: #{tpu_custom_call.1} parent=5 // pred_region
        %s204 = ssub.s32 %s12, 1
        %s205 = smul.u32 2, %s22
        %p206 = scmp.lt.s32.totalorder %s205, 3
        %s207 = scalar_select %p206, %s205, 3
        %p208 = scmp.lt.s32.totalorder %s23, 0
        %s209 = scalar_select %p208, %s23, 0
        %s210 = sadd.s32 %s209, %s207
        %s211 = smul.addr %s210, 8
        %s212 = scalar_lea.vmem %s0, %s211
        %p213 = pneg %p59
        %p214 = pneg %p56
        %s215 = smul.u32 2, %s22
        %p216 = scmp.lt.s32.totalorder %s215, 3
        %s217 = scalar_select %p216, %s215, 3
        %p218 = scmp.lt.s32.totalorder %s24, 0
        %s219 = scalar_select %p218, %s24, 0
        %s220 = sadd.s32 %s219, %s217
        %s221 = smul.addr %s220, 2
        %s222 = scalar_lea.vmem %s1, %s221
        %p223 = pneg %p87
        %p224 = pneg %p84
        %s225 = smul.u32 2, %s22
        %p226 = scmp.lt.s32.totalorder %s225, 3
        %s227 = scalar_select %p226, %s225, 3
        %p228 = scmp.lt.s32.totalorder %s24, 0
        %s229 = scalar_select %p228, %s24, 0
        %s230 = sadd.s32 %s229, %s227
        %s231 = smul.addr %s230, 8
        %s232 = scalar_lea.vmem %s2, %s231
        %p233 = pneg %p115
        %p234 = pneg %p112
        %p235 = pneg %p143
        %p236 = pneg %p140
        %s237 = sand.u32 %s130, 1
        %s238 = scalar_lea.sflag [#allocation5], %s237
        %s239 = sand.u32 %s130, 1
        %s240 = smul.addr %s239, 16
        %s241 = scalar_lea.vmem [#allocation4], %s240
        %s242 = smul.u32 2, %s22
        %p243 = scmp.lt.s32.totalorder %s242, 3
        %s244 = scalar_select %p243, %s242, 3
        %p245 = scmp.lt.s32.totalorder %s23, 0
        %s246 = scalar_select %p245, %s23, 0
        %s247 = sadd.s32 %s246, %s244
        %s248 = smul.addr %s247, 8
        %s249 = scalar_lea.vmem %s0, %s248
        %s250 = smul.u32 2, %s22
        %s251 = smul.u32 2, %s22
        %p252 = scmp.lt.s32.totalorder %s251, 3
        %s253 = scalar_select %p252, %s251, 3
        %p254 = scmp.lt.s32.totalorder %s24, 0
        %s255 = scalar_select %p254, %s24, 0
        %s256 = sadd.s32 %s255, %s253
        %s257 = smul.addr %s256, 2
        %s258 = scalar_lea.vmem %s1, %s257
        %s259 = smul.u32 2, %s22
        %s260 = smul.u32 2, %s22
        %p261 = scmp.lt.s32.totalorder %s260, 3
        %s262 = scalar_select %p261, %s260, 3
        %p263 = scmp.lt.s32.totalorder %s24, 0
        %s264 = scalar_select %p263, %s24, 0
        %s265 = sadd.s32 %s264, %s262
        %s266 = smul.addr %s265, 8
        %s267 = scalar_lea.vmem %s2, %s266
        %s268 = smul.u32 2, %s22
        %s269 = smul.u32 2, %s22
        %p270 = scmp.eq.s32.totalorder %s24, 0
        // Predicated region
        $region33: #{tpu_custom_call.1} parent=31 // pred_check
          %p271 = pneg %p270
        $region34: #{tpu_custom_call.1} parent=31 // pred_check_branch
          %273 = sbr.rel (%p271) target = $region36
        $region35: #{tpu_custom_call.1} parent=31 // pred_region
          %vm274 = vcmask 261120
          %275 = vst.msk [vmem:[#allocation2] sm:$0xff] %vm274, 0.0
          %276 = vst.msk [vmem:[#allocation2 + $0x8] sm:$0xff] %vm274, 0.0
          %vm277 = vcmask 7168
          %278 = vst.msk [vmem:[#allocation3] sm:$0xff] %vm277, 0.0
          %279 = vst.msk [vmem:[#allocation3 + $0x8] sm:$0xff] %vm277, 0.0
        $region36: #{tpu_custom_call.1} parent=31 // pred_fallthru
          _
        %v280 = vld [vmem:[%s249] sm:$0xff]
        %v281 = vld [vmem:[%s249 + $0x8] sm:$0xff]
        %v282 = vld [vmem:[%s258] sm:$0x3]
        %v283 = vld [vmem:[%s258 + $0x2] sm:$0x3]
        %285 = vset.pattern.permute.xlu0 0
        %286 = vperm.xlu0 %285, %v280
        %v287 = vpop.permute.xlu0 %286
        %290 = vset.pattern.permute.xlu0 0
        %291 = vperm.xlu0 %290, %v281
        %v292 = vpop.permute.xlu0 %291
        %v294 = vlaneseq
        %v295 = vshrl.u32 %v294, 7
        %v296 = vsub.s32 0, %v295
        %v297 = vrot.slane %v282, %v296
        %v298 = vlaneseq
        %v299 = vshrl.u32 %v298, 7
        %v300 = vsub.s32 0, %v299
        %v301 = vrot.slane %v283, %v300
        %v302 = vsub.f32 %v287, %v297
        %v303 = vsub.f32 %v292, %v301
        %304 = vset.pattern.permute.xlu0 1
        %305 = vperm.xlu0 %304, %v280
        %v306 = vpop.permute.xlu0 %305
        %308 = vset.pattern.permute.xlu0 1
        %309 = vperm.xlu0 %308, %v281
        %v310 = vpop.permute.xlu0 %309
        %v312 = vlaneseq
        %v313 = vshrl.u32 %v312, 7
        %v314 = vsub.s32 1, %v313
        %v315 = vrot.slane %v282, %v314
        %v316 = vlaneseq
        %v317 = vshrl.u32 %v316, 7
        %v318 = vsub.s32 1, %v317
        %v319 = vrot.slane %v283, %v318
        %v320 = vsub.f32 %v306, %v315
        %v321 = vsub.f32 %v310, %v319
        %v322 = vmul.f32 %v302, %v302
        %v323 = vmul.f32 %v303, %v303
        %v324 = vmul.f32 %v320, %v320
        %v325 = vmul.f32 %v321, %v321
        %v326 = vadd.f32 %v322, %v324
        %v327 = vadd.f32 %v323, %v325
        %v328 = vmul.f32 %v326, -0.001953125
        %v329 = vmul.f32 %v327, -0.001953125
        %v330 = vmul.f32 %v328, 1.442695
        %v331 = vpow.pop %v330
        %v332 = vmul.f32 %v329, 1.442695
        %v333 = vpow.pop %v332
        %v334 = vld [vmem:[%s267] sm:$0xff]
        %v335 = vld [vmem:[%s267 + $0x8] sm:$0xff]
        %v336 = vld [vmem:[#allocation2] sm:$0xff]
        %v337 = vld [vmem:[#allocation2 + $0x8] sm:$0xff]
        %vm338 = vcmask 64512
        %v340 = vsel %vm338, %v331, 0
        %342 = vmatprep.subr.mxu0 0.0
        %343 = vmatpush1.msra.mxu0 %v334
        %344 = vmatprep.subr.mxu0 0.0
        %345 = vmatpush1.msra.mxu0 0.0
        %346 = vmatprep.subr.mxu0 0.0
        %347 = vmatpush1.msra.mxu0 0.0
        %348 = vmatprep.subr.mxu0 0.0
        %349 = vmatpush1.msra.mxu0 0.0
        %350 = vmatprep.subr.mxu0 0.0
        %351 = vmatpush1.msra.mxu0 0.0
        %352 = vmatprep.subr.mxu0 0.0
        %353 = vmatpush1.msra.mxu0 0.0
        %354 = vmatprep.subr.mxu0 0.0
        %355 = vmatpush1.msra.mxu0 0.0
        %356 = vmatprep.subr.mxu0 0.0
        %357 = vmatpush1.msra.mxu0 0.0
        %358 = vmatprep.subr.mxu0 0.0
        %359 = vmatpush1.msra.mxu0 0.0
        %360 = vmatprep.subr.mxu0 0.0
        %361 = vmatpush1.msra.mxu0 0.0
        %362 = vmatprep.subr.mxu0 0.0
        %363 = vmatpush1.msra.mxu0 0.0
        %364 = vmatprep.subr.mxu0 0.0
        %365 = vmatpush1.msra.mxu0 0.0
        %366 = vmatprep.subr.mxu0 0.0
        %367 = vmatpush1.msra.mxu0 0.0
        %368 = vmatprep.subr.mxu0 0.0
        %369 = vmatpush1.msra.mxu0 0.0
        %370 = vmatprep.subr.mxu0 0.0
        %371 = vmatpush1.msra.mxu0 0.0
        %372 = vmatprep.subr.mxu0 0.0
        %373 = vmatpush1.msra.mxu0 0.0
        %374 = vmatprep.subr.mxu0 0.0
        %375 = vmatpush1.msra.mxu0 0.0
        %376 = vmatprep.subr.mxu0 0.0
        %377 = vmatpush1.msra.mxu0 0.0
        %378 = vmatprep.subr.mxu0 0.0
        %379 = vmatpush1.msra.mxu0 0.0
        %380 = vmatprep.subr.mxu0 0.0
        %381 = vmatpush1.msra.mxu0 0.0
        %382 = vmatprep.subr.mxu0 0.0
        %383 = vmatpush1.msra.mxu0 0.0
        %384 = vmatprep.subr.mxu0 0.0
        %385 = vmatpush1.msra.mxu0 0.0
        %386 = vmatprep.subr.mxu0 0.0
        %387 = vmatpush1.msra.mxu0 0.0
        %388 = vmatprep.subr.mxu0 0.0
        %389 = vmatpush1.msra.mxu0 0.0
        %390 = vmatprep.subr.mxu0 0.0
        %391 = vmatpush1.msra.mxu0 0.0
        %392 = vmatprep.subr.mxu0 0.0
        %393 = vmatpush1.msra.mxu0 0.0
        %394 = vmatprep.subr.mxu0 0.0
        %395 = vmatpush1.msra.mxu0 0.0
        %396 = vmatprep.subr.mxu0 0.0
        %397 = vmatpush1.msra.mxu0 0.0
        %398 = vmatprep.subr.mxu0 0.0
        %399 = vmatpush1.msra.mxu0 0.0
        %400 = vmatprep.subr.mxu0 0.0
        %401 = vmatpush1.msra.mxu0 0.0
        %402 = vmatprep.subr.mxu0 0.0
        %403 = vmatpush1.msra.mxu0 0.0
        %404 = vmatprep.subr.mxu0 0.0
        %405 = vmatpush1.msra.mxu0 0.0
        %406 = vmatprep.mubr.f32.mxu0 0.0
        %407 = vmatmul.mubr.f32.gmra.mrb[0].mxu0 %v340
        %v408 = vpop.f32.mrb[0].mxu0
        %v409 = vadd.f32 0.0, %v408
        %v410 = vpop.f32.mrb[0].mxu0
        %411 = vdwg.mxu0
        %v413 = vsel %vm338, %v333, 0
        %415 = vmatprep.subr.mxu0 0.0
        %416 = vmatpush1.msra.mxu0 %v335
        %417 = vmatprep.subr.mxu0 0.0
        %418 = vmatpush1.msra.mxu0 0.0
        %419 = vmatprep.subr.mxu0 0.0
        %420 = vmatpush1.msra.mxu0 0.0
        %421 = vmatprep.subr.mxu0 0.0
        %422 = vmatpush1.msra.mxu0 0.0
        %423 = vmatprep.subr.mxu0 0.0
        %424 = vmatpush1.msra.mxu0 0.0
        %425 = vmatprep.subr.mxu0 0.0
        %426 = vmatpush1.msra.mxu0 0.0
        %427 = vmatprep.subr.mxu0 0.0
        %428 = vmatpush1.msra.mxu0 0.0
        %429 = vmatprep.subr.mxu0 0.0
        %430 = vmatpush1.msra.mxu0 0.0
        %431 = vmatprep.subr.mxu0 0.0
        %432 = vmatpush1.msra.mxu0 0.0
        %433 = vmatprep.subr.mxu0 0.0
        %434 = vmatpush1.msra.mxu0 0.0
        %435 = vmatprep.subr.mxu0 0.0
        %436 = vmatpush1.msra.mxu0 0.0
        %437 = vmatprep.subr.mxu0 0.0
        %438 = vmatpush1.msra.mxu0 0.0
        %439 = vmatprep.subr.mxu0 0.0
        %440 = vmatpush1.msra.mxu0 0.0
        %441 = vmatprep.subr.mxu0 0.0
        %442 = vmatpush1.msra.mxu0 0.0
        %443 = vmatprep.subr.mxu0 0.0
        %444 = vmatpush1.msra.mxu0 0.0
        %445 = vmatprep.subr.mxu0 0.0
        %446 = vmatpush1.msra.mxu0 0.0
        %447 = vmatprep.subr.mxu0 0.0
        %448 = vmatpush1.msra.mxu0 0.0
        %449 = vmatprep.subr.mxu0 0.0
        %450 = vmatpush1.msra.mxu0 0.0
        %451 = vmatprep.subr.mxu0 0.0
        %452 = vmatpush1.msra.mxu0 0.0
        %453 = vmatprep.subr.mxu0 0.0
        %454 = vmatpush1.msra.mxu0 0.0
        %455 = vmatprep.subr.mxu0 0.0
        %456 = vmatpush1.msra.mxu0 0.0
        %457 = vmatprep.subr.mxu0 0.0
        %458 = vmatpush1.msra.mxu0 0.0
        %459 = vmatprep.subr.mxu0 0.0
        %460 = vmatpush1.msra.mxu0 0.0
        %461 = vmatprep.subr.mxu0 0.0
        %462 = vmatpush1.msra.mxu0 0.0
        %463 = vmatprep.subr.mxu0 0.0
        %464 = vmatpush1.msra.mxu0 0.0
        %465 = vmatprep.subr.mxu0 0.0
        %466 = vmatpush1.msra.mxu0 0.0
        %467 = vmatprep.subr.mxu0 0.0
        %468 = vmatpush1.msra.mxu0 0.0
        %469 = vmatprep.subr.mxu0 0.0
        %470 = vmatpush1.msra.mxu0 0.0
        %471 = vmatprep.subr.mxu0 0.0
        %472 = vmatpush1.msra.mxu0 0.0
        %473 = vmatprep.subr.mxu0 0.0
        %474 = vmatpush1.msra.mxu0 0.0
        %475 = vmatprep.subr.mxu0 0.0
        %476 = vmatpush1.msra.mxu0 0.0
        %477 = vmatprep.subr.mxu0 0.0
        %478 = vmatpush1.msra.mxu0 0.0
        %479 = vmatprep.mubr.f32.mxu0 0.0
        %480 = vmatmul.mubr.f32.gmra.mrb[0].mxu0 %v413
        %v481 = vpop.f32.mrb[0].mxu0
        %v482 = vadd.f32 0.0, %v481
        %v483 = vpop.f32.mrb[0].mxu0
        %484 = vdwg.mxu0
        %v485 = vadd.f32 %v336, %v409
        %v486 = vadd.f32 %v337, %v482
        %vm487 = vcmask 261120
        %488 = vst.msk [vmem:[#allocation2] sm:$0xff] %vm487, %v485
        %489 = vst.msk [vmem:[#allocation2 + $0x8] sm:$0xff] %vm487, %v486
        %v490 = vld [vmem:[#allocation3] sm:$0xff]
        %v491 = vld [vmem:[#allocation3 + $0x8] sm:$0xff]
        %v492 = vsel %vm338, %v331, 0.0
        %493 = vadd.xlane.f32.xlu0 %v492
        %v494 = vpop.xlane.xlu0 %493
        %v495 = vsel %vm338, %v333, 0.0
        %496 = vadd.xlane.f32.xlu0 %v495
        %v497 = vpop.xlane.xlu0 %496
        %v498 = vadd.f32 %v490, %v494
        %v499 = vadd.f32 %v491, %v497
        %vm500 = vcmask 7168
        %501 = vst.msk [vmem:[#allocation3] sm:$0xff] %vm500, %v498
        %502 = vst.msk [vmem:[#allocation3 + $0x8] sm:$0xff] %vm500, %v499
        // Predicated region
        $region37: #{tpu_custom_call.1} parent=31 // pred_check
          %p503 = pneg %p270
        $region38: #{tpu_custom_call.1} parent=31 // pred_check_branch
          %505 = sbr.rel (%p503) target = $region40
        $region39: #{tpu_custom_call.1} parent=31 // pred_region
          %v506 = vld [vmem:[#allocation2] sm:$0xff]
          %v507 = vld [vmem:[#allocation2 + $0x8] sm:$0xff]
          %v508 = vld [vmem:[#allocation3] sm:$0xff]
          %v509 = vld [vmem:[#allocation3 + $0x8] sm:$0xff]
          %v510 = vrcp.pop %v508
          %v511 = vrcp.pop %v509
          %513 = vset.pattern.permute.xlu0 0
          %514 = vperm.xlu0 %513, %v510
          %v515 = vpop.permute.xlu0 %514
          %518 = vset.pattern.permute.xlu0 0
          %519 = vperm.xlu0 %518, %v511
          %v520 = vpop.permute.xlu0 %519
          %v522 = vmul.f32 %v506, %v515
          %v523 = vmul.f32 %v507, %v520
          %524 = vst.msk [vmem:[%s241] sm:$0xff] %vm487, %v522
          %525 = vst.msk [vmem:[%s241 + $0x8] sm:$0xff] %vm487, %v523
        $region40: #{tpu_custom_call.1} parent=31 // pred_fallthru
          _
        %s526 = sand.u32 %s130, 1
        %s527 = scalar_lea.sflag [#allocation5], %s526
        %s528 = sand.u32 %s130, 1
        %s529 = smul.addr %s528, 16
        %s530 = scalar_lea.vmem [#allocation4], %s529
        // Predicated region
        $region41: #{tpu_custom_call.1} parent=31 // pred_check
          %p531 = pneg %p140
        $region42: #{tpu_custom_call.1} parent=31 // pred_check_branch
          %533 = sbr.rel (%p531) target = $region44
        $region43: #{tpu_custom_call.1} parent=31 // pred_region
          %s534 = smul.u32 2, %s22
          %s536 = ssub.s32 256, 256
          %537 = vsyncadd %s527, %s536
          %s538 = sadd.s32 %s23, %s534
          %s539 = smul.addr %s538, 128
          %s540 = scalar_lea.hbm %s3, %s539
          %s541 = sshll.u32 %s530, 4
          %s542 = int_to_ptr.vmem [resolvable:$true] %s541
          %547 = dma.vmem_to_hbm [thread:$0]  %s542, 256, %s540, %s527, 128, 128, 8
        $region44: #{tpu_custom_call.1} parent=31 // pred_fallthru
          _
      $region32: #{tpu_custom_call.1} parent=5 // pred_fallthru
        _
      %p548 = scmp.le.s32.totalorder 2, %s12
      // Predicated region
      $region45: #{tpu_custom_call.1} parent=5 // pred_check
        %p549 = pneg %p548
      $region46: #{tpu_custom_call.1} parent=5 // pred_check_branch
        %551 = sbr.rel (%p549) target = $region48
      $region47: #{tpu_custom_call.1} parent=5 // pred_region
        %s552 = ssub.s32 %s12, 2
        // Predicated region
        $region49: #{tpu_custom_call.1} parent=47 // pred_check
          %p553 = pneg %p146
        $region50: #{tpu_custom_call.1} parent=47 // pred_check_branch
          %555 = sbr.rel (%p553) target = $region52
        $region51: #{tpu_custom_call.1} parent=47 // pred_region
          %s556 = sand.u32 %s131, 1
          %s557 = scalar_lea.sflag [#allocation5], %s556
          %s558 = sand.u32 %s131, 1
          %s559 = smul.addr %s558, 16
          %s560 = scalar_lea.vmem [#allocation4], %s559
          %561 = dma.done %s557, 256
        $region52: #{tpu_custom_call.1} parent=47 // pred_fallthru
          _
      $region48: #{tpu_custom_call.1} parent=5 // pred_fallthru
        _
    $region6: #{tpu_custom_call.1} parent=1 // loop_footer
      %s16 = sadd.s32 1, %s12
    $region7: #{tpu_custom_call.1} parent=1 // loop_footer_branch
      %11 = sbr.rel target = $region3
    $region8: #{tpu_custom_call.1} parent=1 // loop_exit
      _
    %562 = vsyncpa [#allocation5], 1
    %s563 = scalar_lea.sflag [#allocation5], 1
    %564 = vsyncpa %s563, 1

</llo_original>
